<compile_context>
chip_gen: v7x
topology: tpu7x:2x2x1
jax: 0.10.0
libtpu: 0.0.40
codegen_flags: <defaults>
</compile_context>

<pallas_src>
import jax
import jax.numpy as jnp
from jax.experimental import pallas as pl
from jax.experimental.pallas import tpu as pltpu


# --------------------------------------------------------------------------- #
# Kernels
# --------------------------------------------------------------------------- #
def _proden_records_fused_kernel(x_ref, t_ref, invb_ref, loss_ref, newt_ref):
    """Per batch tile: per-row NLL term + RECORDS-revised target rows.

    x_ref    : (tb, Cp) logits (class dim padded with -1e30)
    t_ref    : (tb, Cp) confidence rows (padded with 0)
    invb_ref : (1,  Cp) 1 / (bias + 1e-9) (padded with 0)
    """
    x = x_ref[...].astype(jnp.float32)
    t = t_ref[...].astype(jnp.float32)
    invb = invb_ref[...].astype(jnp.float32)

    # ---- loss: -sum(target * log_softmax(x), axis=1), kept 2-D (tb, 1) ------
    m = jnp.max(x, axis=1, keepdims=True)
    xm = x - m
    ex = jnp.exp(xm)                                   # reused below
    lse = jnp.log(jnp.sum(ex, axis=1, keepdims=True))
    loss_ref[...] = -jnp.sum(t * (xm - lse), axis=1, keepdims=True)

    # ---- RECORDS target update ----------------------------------------------
    # revised = w * softmax(x - log(bias+eps)) row-normalised, w = where(t>0,1,t).
    # Both the softmax denominator and the exp(-m) shift cancel in the row
    # normalisation, so exp(xm) is reused: no second exp pass, no second row-max.
    w = jnp.where(t > 0.0, 1.0, t)
    num = w * ex * invb
    denom = jnp.sum(num, axis=1, keepdims=True)
    newt_ref[...] = (num * pl.reciprocal(denom, approx=False)).astype(newt_ref.dtype)


def _proden_loss_only_kernel(x_ref, t_ref, loss_ref):
    """update_target=False path: loss term only."""
    x = x_ref[...].astype(jnp.float32)
    t = t_ref[...].astype(jnp.float32)
    m = jnp.max(x, axis=1, keepdims=True)
    xm = x - m
    lse = jnp.log(jnp.sum(jnp.exp(xm), axis=1, keepdims=True))
    loss_ref[...] = -jnp.sum(t * (xm - lse), axis=1, keepdims=True)


# --------------------------------------------------------------------------- #
# Wrapper helpers
# --------------------------------------------------------------------------- #
_NEG_BIG = -1e30   # finite "−inf" for padded class lanes (exp -> 0, 0*(-1e30) = 0)


def _round_up(x, m):
    return ((x + m - 1) // m) * m


def _sublane_multiple(dtype):
    # f32 -> (8,128), bf16/f16 -> (16,128), int8/fp8 -> (32,128)
    return {4: 8, 2: 16, 1: 32}.get(jnp.dtype(dtype).itemsize, 8)


def _vmem_budgets():
    """(tile_budget_bytes, vmem_limit_bytes), picked per TPU generation."""
    cap = 0
    try:
        cap = int(getattr(pltpu.get_tpu_info(), "vmem_capacity_bytes", 0) or 0)
    except Exception:
        cap = 0
    if cap >= 100 * 1024 * 1024:          # v5e / v6e: 128 MiB physical VMEM
        return 48 * 1024 * 1024, 64 * 1024 * 1024
    # v7x (64 MiB physical) or unknown generation: stay conservative.
    return 20 * 1024 * 1024, 32 * 1024 * 1024


def _pick_tile_b(n_rows, c_pad, stream_itemsizes, n_temps_f32, sublane, budget):
    """Largest batch tile fitting the VMEM budget.

    Accounts for double-buffered tiled I/O streams plus the in-kernel full-tile
    f32 temporaries, rounds to the dtype sublane tile, and keeps the 'parallel'
    grid at >= 2 steps when possible so v7x can shard across both TensorCores.
    """
    per_row = c_pad * (2 * sum(stream_itemsizes) + 4 * n_temps_f32)
    tb = max(budget // max(per_row, 1), sublane)
    tb = min(tb, _round_up(n_rows, sublane))          # don't tile past the batch
    if n_rows >= 2 * sublane:                         # keep >= 2 grid steps
        tb = min(tb, _round_up(-(-n_rows // 2), sublane))
    return max((tb // sublane) * sublane, sublane)


# --------------------------------------------------------------------------- #
# Wrapper
# --------------------------------------------------------------------------- #
def proden_loss_records_forward(output1, feat, confidence, index,
                                fc_weight, fc_bias, feat_mean=None,
                                update_target=True, tile_b=None):
    """Functional forward of Proden_loss_RECORDS.

    output1:    (N, C) logits
    feat:       (N, D) features
    confidence: (M, C) per-sample confidence buffer (the module's state)
    index:      (N,)   int indices into confidence
    fc_weight:  (C, D), fc_bias: (C,)  -- model.module.fc parameters
    feat_mean:  (D,) running feature mean or None (module's state)

    Returns (loss, new_confidence, new_feat_mean).
    """
    n, c = output1.shape
    x_isz = jnp.dtype(output1.dtype).itemsize
    t_isz = jnp.dtype(confidence.dtype).itemsize
    sublane = max(_sublane_multiple(output1.dtype),
                  _sublane_multiple(confidence.dtype))
    tile_budget, vmem_limit = _vmem_budgets()

    # Confidence gather + feature-mean EMA + RECORDS bias: XLA gather / O(D) /
    # O(D*C) matvec, kept in plain JAX.
    # TODO(synk): fuse the confidence gather/scatter into the kernel
    # (scalar-prefetched index + per-row DMA with memory_space=pl.ANY and
    # input_output_aliases) when C*itemsize is large enough to amortize the
    # per-row DMA descriptor cost; for small class counts XLA's vectorized
    # gather/scatter is the better tool.
    target = jnp.take(confidence, index, axis=0)                 # (n, c)

    batch_mean = jnp.mean(jax.lax.stop_gradient(feat).astype(jnp.float32), axis=0)
    new_feat_mean = (0.1 * batch_mean if feat_mean is None
                     else 0.9 * feat_mean + 0.1 * batch_mean)

    cparams = pltpu.CompilerParams(
        dimension_semantics=("parallel",),       # disjoint output rows per step
        vmem_limit_bytes=vmem_limit,
    )

    if update_target:
        # Lane-dense class dim for the big (N, C) revised-target store.
        c_pad = _round_up(c, 128)
        if c_pad != c:
            x_p = jnp.pad(output1, ((0, 0), (0, c_pad - c)),
                          constant_values=_NEG_BIG)
            t_p = jnp.pad(target, ((0, 0), (0, c_pad - c)))
        else:
            x_p, t_p = output1, target

        # RECORDS debiasing vector (detached, mirrors .detach() in PyTorch).
        bias_logits = jax.lax.stop_gradient(
            new_feat_mean @ fc_weight.astype(jnp.float32).T
            + fc_bias.astype(jnp.float32))
        bias = jax.nn.softmax(bias_logits)
        invb = (1.0 / (bias + 1e-9)).astype(jnp.float32)
        if c_pad != c:
            invb = jnp.pad(invb, (0, c_pad - c))
        invb = invb.reshape(1, c_pad)

        out_isz = t_isz
        if tile_b is None:
            tile_b = _pick_tile_b(n, c_pad, (x_isz, t_isz, out_isz),
                                  n_temps_f32=8, sublane=sublane,
                                  budget=tile_budget)
        grid = (pl.cdiv(n, tile_b),)
        row_spec = pl.BlockSpec((tile_b, c_pad), lambda i: (i, 0))
        loss_spec = pl.BlockSpec((tile_b, 1), lambda i: (i, 0))
        bias_spec = pl.BlockSpec((1, c_pad), lambda i: (0, 0))

        cost = pl.CostEstimate(
            flops=12 * n * c_pad,
            transcendentals=n * c_pad,
            bytes_accessed=n * c_pad * (x_isz + t_isz + out_isz) + 4 * (n + c_pad),
        )

        loss_rows, new_t_full = pl.pallas_call(
            _proden_records_fused_kernel,
            out_shape=(
                jax.ShapeDtypeStruct((n, 1), jnp.float32),
                jax.ShapeDtypeStruct((n, c_pad), confidence.dtype),
            ),
            grid_spec=pltpu.PrefetchScalarGridSpec(
                num_scalar_prefetch=0,
                grid=grid,
                in_specs=[row_spec, row_spec, bias_spec],
                out_specs=(loss_spec, row_spec),
            ),
            compiler_params=cparams,
            cost_estimate=cost,
        )(x_p, t_p, invb)

        new_t = new_t_full[:, :c] if c_pad != c else new_t_full
        new_confidence = confidence.at[index].set(
            jax.lax.stop_gradient(new_t).astype(confidence.dtype))
    else:
        # Loss-only path: no large (N, C) output, so keep the native class width
        # (block last dim == full array dim) and skip the padding copies.
        if tile_b is None:
            tile_b = _pick_tile_b(n, c, (x_isz, t_isz),
                                  n_temps_f32=6, sublane=sublane,
                                  budget=tile_budget)
        grid = (pl.cdiv(n, tile_b),)
        row_spec = pl.BlockSpec((tile_b, c), lambda i: (i, 0))
        loss_spec = pl.BlockSpec((tile_b, 1), lambda i: (i, 0))
        cost = pl.CostEstimate(
            flops=7 * n * c,
            transcendentals=n * c,
            bytes_accessed=n * c * (x_isz + t_isz) + 4 * n,
        )
        loss_rows = pl.pallas_call(
            _proden_loss_only_kernel,
            out_shape=jax.ShapeDtypeStruct((n, 1), jnp.float32),
            grid_spec=pltpu.PrefetchScalarGridSpec(
                num_scalar_prefetch=0,
                grid=grid,
                in_specs=[row_spec, row_spec],
                out_specs=loss_spec,
            ),
            compiler_params=cparams,
            cost_estimate=cost,
        )(output1, target)
        new_confidence = confidence

    loss = jnp.sum(loss_rows) / jnp.float32(n)
    return loss.astype(jnp.float32), new_confidence, new_feat_mean


# --------------------------------------------------------------------------- #
# Pure-JAX reference (step-for-step port of the PyTorch module)
# --------------------------------------------------------------------------- #
def _ref_forward(output1, feat, confidence, index, fc_weight, fc_bias,
                 feat_mean=None, update_target=True):
    output = jax.nn.softmax(output1, axis=1)
    target = confidence[index, :]
    l = target * jnp.log(output)
    loss = -jnp.sum(l) / l.shape[0]
    batch_mean = jnp.mean(feat, axis=0)
    fm = 0.1 * batch_mean if feat_mean is None else 0.9 * feat_mean + 0.1 * batch_mean
    new_conf = confidence
    if update_target:
        bias = jax.nn.softmax(fm @ fc_weight.T + fc_bias)
        logits = output1 - jnp.log(bias + 1e-9)
        out2 = jax.nn.softmax(logits, axis=1)
        revised = jnp.where(target > 0, 1.0, target) * out2
        revised = revised / jnp.sum(revised, axis=1, keepdims=True)
        new_conf = confidence.at[index].set(revised)
    return loss, new_conf, fm


# --------------------------------------------------------------------------- #
# Self-test
# --------------------------------------------------------------------------- #
def _run_case(key, M, N, C, D):
    kx, kf, kc1, kc2, ki, kw, kb = jax.random.split(key, 7)

    output1 = jax.random.normal(kx, (N, C), dtype=jnp.float32)
    feat = jax.random.normal(kf, (N, D), dtype=jnp.float32)

    # confidence buffer: row-normalised partial-label matrix over the dataset
    true_cls = jax.random.randint(kc1, (M,), 0, C)
    extra = (jax.random.uniform(kc2, (M, C)) < 0.2).astype(jnp.float32)
    partial = jnp.maximum(jax.nn.one_hot(true_cls, C, dtype=jnp.float32), extra)
    confidence = partial / jnp.sum(partial, axis=1, keepdims=True)

    index = jax.random.permutation(ki, M)[:N]

    fc_weight = 0.1 * jax.random.normal(kw, (C, D), dtype=jnp.float32)
    fc_bias = 0.1 * jax.random.normal(kb, (C,), dtype=jnp.float32)

    # --- first call: feat_mean is None, update_target=True (fused path) ------
    loss, conf1, fm1 = proden_loss_records_forward(
        output1, feat, confidence, index, fc_weight, fc_bias,
        feat_mean=None, update_target=True)
    jax.block_until_ready((loss, conf1, fm1))

    r_loss, r_conf1, r_fm1 = _ref_forward(
        output1, feat, confidence, index, fc_weight, fc_bias,
        feat_mean=None, update_target=True)
    assert jnp.allclose(loss, r_loss, rtol=1e-5, atol=1e-5), (loss, r_loss)
    assert jnp.allclose(fm1, r_fm1, rtol=1e-5, atol=1e-5)
    assert jnp.allclose(conf1, r_conf1, rtol=1e-5, atol=1e-5)

    # --- second call: EMA feat_mean, update_target=False (loss-only kernel) --
    loss2, conf2, fm2 = proden_loss_records_forward(
        output1, feat, conf1, index, fc_weight, fc_bias,
        feat_mean=fm1, update_target=False)
    jax.block_until_ready((loss2, conf2, fm2))

    r_loss2, r_conf2, r_fm2 = _ref_forward(
        output1, feat, r_conf1, index, fc_weight, fc_bias,
        feat_mean=r_fm1, update_target=False)
    assert jnp.allclose(loss2, r_loss2, rtol=1e-5, atol=1e-5), (loss2, r_loss2)
    assert jnp.allclose(fm2, r_fm2, rtol=1e-5, atol=1e-5)
    assert jnp.allclose(conf2, r_conf2, rtol=1e-5, atol=1e-5)


if __name__ == "__main__":
    key = jax.random.PRNGKey(0)
    k1, k2 = jax.random.split(key)
    # C not a multiple of 128 and N not a multiple of 8: exercises lane padding
    # and the overhanging last batch block.
    _run_case(k1, M=64, N=19, C=10, D=24)
    # C already lane-aligned: exercises the no-pad path.
    _run_case(k2, M=32, N=24, C=128, D=16)
    print("KERNEL_OK")
</pallas_src>

<mosaic_0001>
module attributes {stable_mosaic.version = 11 : i64} {
  func.func @_proden_records_fused_kernel(%arg0: i32, %arg1: memref<16x128xf32, #tpu.memory_space<vmem>>, %arg2: memref<16x128xf32, #tpu.memory_space<vmem>>, %arg3: memref<1x128xf32, #tpu.memory_space<vmem>>, %arg4: memref<16x1xf32, #tpu.memory_space<vmem>>, %arg5: memref<16x128xf32, #tpu.memory_space<vmem>>) attributes {dimension_semantics = [#tpu.dimension_semantics<parallel>], iteration_bounds = array<i64: 2>, scalar_prefetch = 0 : i64, scratch_operands = 0 : i64, tpu.core_type = #tpu.core_type<tc>, window_params = [{transform_indices = @transform_0, window_bounds = array<i64: 16, 128>}, {transform_indices = @transform_1, window_bounds = array<i64: 16, 128>}, {pipeline_mode = #tpu.pipeline_mode<synchronous>, transform_indices = @transform_2, window_bounds = array<i64: 1, 128>}, {transform_indices = @transform_3, window_bounds = array<i64: 16, 1>}, {transform_indices = @transform_4, window_bounds = array<i64: 16, 128>}]} {
    %c0 = arith.constant 0 : index
    %c0_0 = arith.constant 0 : index
    %0 = vector.load %arg1[%c0, %c0_0] : memref<16x128xf32, #tpu.memory_space<vmem>>, vector<16x128xf32>
    %c0_1 = arith.constant 0 : index
    %c0_2 = arith.constant 0 : index
    %1 = vector.load %arg2[%c0_1, %c0_2] : memref<16x128xf32, #tpu.memory_space<vmem>>, vector<16x128xf32>
    %c0_3 = arith.constant 0 : index
    %c0_4 = arith.constant 0 : index
    %2 = vector.load %arg3[%c0_3, %c0_4] : memref<1x128xf32, #tpu.memory_space<vmem>>, vector<1x128xf32>
    %cst = arith.constant dense<0xFF800000> : vector<16xf32>
    %3 = vector.multi_reduction <maximumf>, %0, %cst [1] : vector<16x128xf32> to vector<16xf32>
    %4 = vector.shape_cast %3 : vector<16xf32> to vector<16x1xf32>
    %5 = vector.broadcast %4 : vector<16x1xf32> to vector<16x128xf32>
    %6 = arith.subf %0, %5 : vector<16x128xf32>
    %7 = math.exp %6 : vector<16x128xf32>
    %cst_5 = arith.constant dense<0.000000e+00> : vector<16xf32>
    %8 = vector.multi_reduction <add>, %7, %cst_5 [1] : vector<16x128xf32> to vector<16xf32>
    %9 = vector.shape_cast %8 : vector<16xf32> to vector<16x1xf32>
    %10 = math.log %9 : vector<16x1xf32>
    %11 = vector.broadcast %10 : vector<16x1xf32> to vector<16x128xf32>
    %12 = arith.subf %6, %11 : vector<16x128xf32>
    %13 = arith.mulf %1, %12 : vector<16x128xf32>
    %cst_6 = arith.constant dense<0.000000e+00> : vector<16xf32>
    %14 = vector.multi_reduction <add>, %13, %cst_6 [1] : vector<16x128xf32> to vector<16xf32>
    %15 = vector.shape_cast %14 : vector<16xf32> to vector<16x1xf32>
    %cst_7 = arith.constant 0.000000e+00 : f32
    %16 = vector.broadcast %cst_7 : f32 to vector<16x1xf32>
    %17 = arith.subf %16, %15 : vector<16x1xf32>
    %c0_8 = arith.constant 0 : index
    %c0_9 = arith.constant 0 : index
    %18 = vector.load %arg4[%c0_8, %c0_9] : memref<16x1xf32, #tpu.memory_space<vmem>>, vector<16x1xf32>
    tpu.vector_store %arg4[%c0_8, %c0_9], %17 {strides = array<i32>} : memref<16x1xf32, #tpu.memory_space<vmem>>, vector<16x1xf32>,
    %cst_10 = arith.constant 0.000000e+00 : f32
    %19 = vector.broadcast %cst_10 : f32 to vector<16x128xf32>
    %20 = arith.cmpf ogt, %1, %19 : vector<16x128xf32>
    %cst_11 = arith.constant 1.000000e+00 : f32
    %21 = vector.broadcast %cst_11 : f32 to vector<16x128xf32>
    %22 = arith.select %20, %21, %1 : vector<16x128xi1>, vector<16x128xf32>
    %23 = arith.mulf %22, %7 : vector<16x128xf32>
    %24 = vector.broadcast %2 : vector<1x128xf32> to vector<16x128xf32>
    %25 = arith.mulf %23, %24 : vector<16x128xf32>
    %cst_12 = arith.constant dense<0.000000e+00> : vector<16xf32>
    %26 = vector.multi_reduction <add>, %25, %cst_12 [1] : vector<16x128xf32> to vector<16xf32>
    %27 = vector.shape_cast %26 : vector<16xf32> to vector<16x1xf32>
    %28 = tpu.reciprocal %27 : vector<16x1xf32> -> vector<16x1xf32>
    %29 = vector.broadcast %28 : vector<16x1xf32> to vector<16x128xf32>
    %30 = arith.mulf %25, %29 : vector<16x128xf32>
    %c0_13 = arith.constant 0 : index
    %c0_14 = arith.constant 0 : index
    %31 = vector.load %arg5[%c0_13, %c0_14] : memref<16x128xf32, #tpu.memory_space<vmem>>, vector<16x128xf32>
    tpu.vector_store %arg5[%c0_13, %c0_14], %30 {strides = array<i32>} : memref<16x128xf32, #tpu.memory_space<vmem>>, vector<16x128xf32>,
    return
  }
  func.func @transform_0(%arg0: i32) -> (i32, i32) {
    %c0_i32 = arith.constant 0 : i32
    %c0_i32_0 = arith.constant 0 : i32
    return %arg0, %c0_i32 : i32, i32
  }
  func.func @transform_1(%arg0: i32) -> (i32, i32) {
    %c0_i32 = arith.constant 0 : i32
    %c0_i32_0 = arith.constant 0 : i32
    return %arg0, %c0_i32 : i32, i32
  }
  func.func @transform_2(%arg0: i32) -> (i32, i32) {
    %c0_i32 = arith.constant 0 : i32
    %c0_i32_0 = arith.constant 0 : i32
    %c0_i32_1 = arith.constant 0 : i32
    return %c0_i32, %c0_i32_0 : i32, i32
  }
  func.func @transform_3(%arg0: i32) -> (i32, i32) {
    %c0_i32 = arith.constant 0 : i32
    %c0_i32_0 = arith.constant 0 : i32
    return %arg0, %c0_i32 : i32, i32
  }
  func.func @transform_4(%arg0: i32) -> (i32, i32) {
    %c0_i32 = arith.constant 0 : i32
    %c0_i32_0 = arith.constant 0 : i32
    return %arg0, %c0_i32 : i32, i32
  }
}

</mosaic_0001>

<llo_original>
// kernel: tpu_custom_call.1
$region0: #{tpu_custom_call.1}
  #allocation0 [shape = 'u32[]', space=smem, size = 0x4, offset = 0x4, fixed_abs, tag = 'smem constant byte address 0x4 - core index']
  #allocation1 [shape = 'u32[144,128]{1,0:T(1,128)}', space=vmem, size = 0x12000, scoped, tag = 'internal scratch']
  %s0 = inlined_call_operand.hbm [shape: f32[19,128], index: 0, kind: input, shape index: {}]
  %s1 = inlined_call_operand.hbm [shape: f32[19,128], index: 1, kind: input, shape index: {}]
  %s2 = inlined_call_operand.vmem [shape: f32[1,128], index: 2, kind: input, shape index: {}]
  %s3 = inlined_call_operand.vmem [shape: f32[19,1], index: 3, kind: output, shape index: {0}]
  %s4 = inlined_call_operand.hbm [shape: f32[19,128], index: 4, kind: output, shape index: {1}]
  %5 = xla_tuple %s3, %s4
  %s6 = sld [smem:[#allocation0]]
  $region109: #{tpu_custom_call.1} parent=0
    _
  %s8 = ssub.s32 1, %s6
  %s9 = scalar_select 0, %s8, %s6
  $region1: #{tpu_custom_call.1} parent=0
    #allocation2 [shape = 'u8[16384]{0}', space=vmem, size = 0x4000, scoped, tag = 'input window, operand 0']
    #allocation3 [shape = 's32[2]{0}', space=sflag, size = 0x8, scoped, tag = 'scoped memory for tpu_custom_call.1']
    #allocation4 [shape = 's32[2]{0}', space=sflag, size = 0x8, scoped, tag = 'scoped memory for tpu_custom_call.1']
    #allocation5 [shape = 'u8[16384]{0}', space=vmem, size = 0x4000, scoped, tag = 'input window, operand 1']
    #allocation6 [shape = 's32[2]{0}', space=sflag, size = 0x8, scoped, tag = 'scoped memory for tpu_custom_call.1']
    #allocation7 [shape = 'u8[16384]{0}', space=vmem, size = 0x4000, scoped, tag = 'output window, operand 0']
    #allocation8 [shape = 'u8[16384]{0}', space=vmem, size = 0x4000, scoped, tag = 'output window, operand 1']
    %10 = vsyncpa [#allocation3], 0
    %s11 = scalar_lea.sflag [#allocation3], 1
    %12 = vsyncpa %s11, 0
    %13 = vsyncpa [#allocation6], 0
    %s14 = scalar_lea.sflag [#allocation6], 1
    %15 = vsyncpa %s14, 0
    %16 = vsyncpa [#allocation4], 0
    %s17 = scalar_lea.sflag [#allocation4], 1
    %18 = vsyncpa %s17, 0
    loop: start=0, step=1, limit=4
    $region2: #{tpu_custom_call.1} parent=1 // loop_pre_header
      _
    $region3: #{tpu_custom_call.1} parent=1 // loop_header
      %s20 = sphi 0, %s24
      %p21 = scmp.ge.s32.totalorder %s20, 4
      %s30 = sphi 0, %s32
      %s33 = sphi 0, %s30
      %s34 = sphi 0, %s33
      %s50 = sphi 0, %s34
      %s56 = sphi 0, %s58
      %s59 = sphi 0, %s56
      %s60 = sphi 0, %s59
      %s76 = sphi 0, %s60
      %s80 = sphi 0, %s80
      %s82 = sphi 0, %s80
      %s83 = sphi 0, %s82
      %s97 = sphi 0, %s83
      %s103 = sphi 0, %s105
      %s106 = sphi 0, %s103
      %s107 = sphi 0, %s106
      %s123 = sphi 0, %s107
      %s129 = sphi 0, %s131
      %s132 = sphi 0, %s129
      %s133 = sphi 0, %s132
      %s149 = sphi 0, %s133
    $region4: #{tpu_custom_call.1} parent=1 // loop_header_branch
      %23 = sbr.rel (%p21) target = $region8
    $region5: #{tpu_custom_call.1} parent=1 // loop_body
      %s25 = ssub.s32 %s20, 1
      %s26 = ssub.s32 %s20, 2
      %s27 = sadd.s32 %s20, 1
      %s28 = ssub.s32 %s20, %s27
      %p29 = scmp.eq.s32.totalorder %s28, 0
      %s31 = sadd.s32 %s30, 1
      %s32 = scalar_select %p29, %s30, %s31
      %p35 = pneg %p29
      %p36 = scmp.eq.s32.totalorder %s20, 1
      %p37 = por %p35, %p36
      %p38 = scmp.ne.s32.totalorder %s30, %s33
      %p39 = scmp.eq.s32.totalorder %s20, 0
      %p40 = por %p38, %p39
      %p41 = scmp.ne.s32.totalorder %s30, %s33
      %p42 = scmp.eq.s32.totalorder %s25, 1
      %p43 = por %p41, %p42
      %p44 = scmp.ne.s32.totalorder %s33, %s34
      %p45 = scmp.eq.s32.totalorder %s25, 0
      %p46 = por %p44, %p45
      %p47 = scmp.ne.s32.totalorder %s33, %s34
      %p48 = scmp.eq.s32.totalorder %s26, 1
      %p49 = por %p47, %p48
      %p51 = scmp.ne.s32.totalorder %s34, %s50
      %p52 = scmp.eq.s32.totalorder %s26, 0
      %p53 = por %p51, %p52
      %s54 = ssub.s32 %s20, %s27
      %p55 = scmp.eq.s32.totalorder %s54, 0
      %s57 = sadd.s32 %s56, 1
      %s58 = scalar_select %p55, %s56, %s57
      %p61 = pneg %p55
      %p62 = scmp.eq.s32.totalorder %s20, 1
      %p63 = por %p61, %p62
      %p64 = scmp.ne.s32.totalorder %s56, %s59
      %p65 = scmp.eq.s32.totalorder %s20, 0
      %p66 = por %p64, %p65
      %p67 = scmp.ne.s32.totalorder %s56, %s59
      %p68 = scmp.eq.s32.totalorder %s25, 1
      %p69 = por %p67, %p68
      %p70 = scmp.ne.s32.totalorder %s59, %s60
      %p71 = scmp.eq.s32.totalorder %s25, 0
      %p72 = por %p70, %p71
      %p73 = scmp.ne.s32.totalorder %s59, %s60
      %p74 = scmp.eq.s32.totalorder %s26, 1
      %p75 = por %p73, %p74
      %p77 = scmp.ne.s32.totalorder %s60, %s76
      %p78 = scmp.eq.s32.totalorder %s26, 0
      %p79 = por %p77, %p78
      %s81 = sadd.s32 %s80, 1
      %p84 = scmp.eq.s32.totalorder %s20, 1
      %p85 = scmp.ne.s32.totalorder %s80, %s82
      %p86 = scmp.eq.s32.totalorder %s20, 0
      %p87 = por %p85, %p86
      %p88 = scmp.ne.s32.totalorder %s80, %s82
      %p89 = scmp.eq.s32.totalorder %s25, 1
      %p90 = por %p88, %p89
      %p91 = scmp.ne.s32.totalorder %s82, %s83
      %p92 = scmp.eq.s32.totalorder %s25, 0
      %p93 = por %p91, %p92
      %p94 = scmp.ne.s32.totalorder %s82, %s83
      %p95 = scmp.eq.s32.totalorder %s26, 1
      %p96 = por %p94, %p95
      %p98 = scmp.ne.s32.totalorder %s83, %s97
      %p99 = scmp.eq.s32.totalorder %s26, 0
      %p100 = por %p98, %p99
      %s101 = ssub.s32 %s20, %s27
      %p102 = scmp.eq.s32.totalorder %s101, 0
      %s104 = sadd.s32 %s103, 1
      %s105 = scalar_select %p102, %s103, %s104
      %p108 = pneg %p102
      %p109 = scmp.eq.s32.totalorder %s20, 1
      %p110 = por %p108, %p109
      %p111 = scmp.ne.s32.totalorder %s103, %s106
      %p112 = scmp.eq.s32.totalorder %s20, 0
      %p113 = por %p111, %p112
      %p114 = scmp.ne.s32.totalorder %s103, %s106
      %p115 = scmp.eq.s32.totalorder %s25, 1
      %p116 = por %p114, %p115
      %p117 = scmp.ne.s32.totalorder %s106, %s107
      %p118 = scmp.eq.s32.totalorder %s25, 0
      %p119 = por %p117, %p118
      %p120 = scmp.ne.s32.totalorder %s106, %s107
      %p121 = scmp.eq.s32.totalorder %s26, 1
      %p122 = por %p120, %p121
      %p124 = scmp.ne.s32.totalorder %s107, %s123
      %p125 = scmp.eq.s32.totalorder %s26, 0
      %p126 = por %p124, %p125
      %s127 = ssub.s32 %s20, %s27
      %p128 = scmp.eq.s32.totalorder %s127, 0
      %s130 = sadd.s32 %s129, 1
      %s131 = scalar_select %p128, %s129, %s130
      %p134 = pneg %p128
      %p135 = scmp.eq.s32.totalorder %s20, 1
      %p136 = por %p134, %p135
      %p137 = scmp.ne.s32.totalorder %s129, %s132
      %p138 = scmp.eq.s32.totalorder %s20, 0
      %p139 = por %p137, %p138
      %p140 = scmp.ne.s32.totalorder %s129, %s132
      %p141 = scmp.eq.s32.totalorder %s25, 1
      %p142 = por %p140, %p141
      %p143 = scmp.ne.s32.totalorder %s132, %s133
      %p144 = scmp.eq.s32.totalorder %s25, 0
      %p145 = por %p143, %p144
      %p146 = scmp.ne.s32.totalorder %s132, %s133
      %p147 = scmp.eq.s32.totalorder %s26, 1
      %p148 = por %p146, %p147
      %p150 = scmp.ne.s32.totalorder %s133, %s149
      %p151 = scmp.eq.s32.totalorder %s26, 0
      %p152 = por %p150, %p151
      %p153 = scmp.le.s32.totalorder 1, %s20
      %p154 = scmp.lt.s32.totalorder %s20, 3
      %p155 = pnand %p153, %p154
      %p156 = pneg %p155
      // Predicated region
      $region9: #{tpu_custom_call.1} parent=5 // pred_check
        _
      $region10: #{tpu_custom_call.1} parent=5 // pred_check_branch
        %158 = sbr.rel (%p155) target = $region12
      $region11: #{tpu_custom_call.1} parent=5 // pred_region
        %s159 = ssub.s32 %s20, 1
        // Predicated region
        $region13: #{tpu_custom_call.1} parent=11 // pred_check
          %p160 = pneg %p93
        $region14: #{tpu_custom_call.1} parent=11 // pred_check_branch
          %162 = sbr.rel (%p160) target = $region16
        $region15: #{tpu_custom_call.1} parent=11 // pred_region
          _
        $region16: #{tpu_custom_call.1} parent=11 // pred_fallthru
          _
      $region12: #{tpu_custom_call.1} parent=5 // pred_fallthru
        _
      %p163 = scmp.lt.s32.totalorder %s20, 2
      // Predicated region
      $region17: #{tpu_custom_call.1} parent=5 // pred_check
        %p164 = pneg %p163
      $region18: #{tpu_custom_call.1} parent=5 // pred_check_branch
        %166 = sbr.rel (%p164) target = $region20
      $region19: #{tpu_custom_call.1} parent=5 // pred_region
        // Predicated region
        $region21: #{tpu_custom_call.1} parent=19 // pred_check
          %p167 = pneg %p40
        $region22: #{tpu_custom_call.1} parent=19 // pred_check_branch
          %169 = sbr.rel (%p167) target = $region24
        $region23: #{tpu_custom_call.1} parent=19 // pred_region
          %s170 = sand.u32 %s30, 1
          %s171 = scalar_lea.sflag [#allocation3], %s170
          %s172 = sand.u32 %s30, 1
          %s173 = smul.addr %s172, 16
          %s174 = scalar_lea.vmem [#allocation2], %s173
          %s175 = smul.u32 2, %s20
          %s176 = ssub.s32 3, %s175
          %p177 = scmp.lt.s32.totalorder %s176, 2
          %s178 = scalar_select %p177, %s176, 2
          %s179 = smul.u32 128, %s178
          %s181 = ssub.s32 256, %s179
          %182 = vsyncadd %s171, %s181
          %p183 = scmp.ne.s32.totalorder 0, %s179
          %s184 = smul.addr %s175, 128
          %s185 = scalar_lea.hbm %s0, %s184
          %s186 = smul.u32 8, %s178
          %s187 = sshll.u32 %s174, 4
          %s188 = int_to_ptr.vmem [resolvable:$true] %s187
          %s189 = sshll.u32 %s186, 4
          %193 = dma.hbm_to_vmem [thread:$0]  (%p183), %s185, %s189, %s188, %s171, 128, 128, 8
        $region24: #{tpu_custom_call.1} parent=19 // pred_fallthru
          _
        // Predicated region
        $region25: #{tpu_custom_call.1} parent=19 // pred_check
          %p194 = pneg %p66
        $region26: #{tpu_custom_call.1} parent=19 // pred_check_branch
          %196 = sbr.rel (%p194) target = $region28
        $region27: #{tpu_custom_call.1} parent=19 // pred_region
          %s197 = sand.u32 %s56, 1
          %s198 = scalar_lea.sflag [#allocation6], %s197
          %s199 = sand.u32 %s56, 1
          %s200 = smul.addr %s199, 16
          %s201 = scalar_lea.vmem [#allocation5], %s200
          %s202 = smul.u32 2, %s20
          %s203 = ssub.s32 3, %s202
          %p204 = scmp.lt.s32.totalorder %s203, 2
          %s205 = scalar_select %p204, %s203, 2
          %s206 = smul.u32 128, %s205
          %s208 = ssub.s32 256, %s206
          %209 = vsyncadd %s198, %s208
          %p210 = scmp.ne.s32.totalorder 0, %s206
          %s211 = smul.addr %s202, 128
          %s212 = scalar_lea.hbm %s1, %s211
          %s213 = smul.u32 8, %s205
          %s214 = sshll.u32 %s201, 4
          %s215 = int_to_ptr.vmem [resolvable:$true] %s214
          %s216 = sshll.u32 %s213, 4
          %220 = dma.hbm_to_vmem [thread:$0]  (%p210), %s212, %s216, %s215, %s198, 128, 128, 8
        $region28: #{tpu_custom_call.1} parent=19 // pred_fallthru
          _
      $region20: #{tpu_custom_call.1} parent=5 // pred_fallthru
        _
      %p221 = scmp.le.s32.totalorder 1, %s20
      %p222 = scmp.lt.s32.totalorder %s20, 3
      %p223 = pnand %p221, %p222
      %p224 = pneg %p223
      // Predicated region
      $region29: #{tpu_custom_call.1} parent=5 // pred_check
        _
      $region30: #{tpu_custom_call.1} parent=5 // pred_check_branch
        %226 = sbr.rel (%p223) target = $region32
      $region31: #{tpu_custom_call.1} parent=5 // pred_region
        %s227 = ssub.s32 %s20, 1
        %s228 = sand.u32 %s33, 1
        %s229 = scalar_lea.sflag [#allocation3], %s228
        %s230 = sand.u32 %s33, 1
        %s231 = smul.addr %s230, 16
        %s232 = scalar_lea.vmem [#allocation2], %s231
        // Predicated region
        $region33: #{tpu_custom_call.1} parent=31 // pred_check
          %p233 = pneg %p46
        $region34: #{tpu_custom_call.1} parent=31 // pred_check_branch
          %235 = sbr.rel (%p233) target = $region36
        $region35: #{tpu_custom_call.1} parent=31 // pred_region
          %236 = dma.done %s229, 256
        $region36: #{tpu_custom_call.1} parent=31 // pred_fallthru
          _
        %s237 = sand.u32 %s59, 1
        %s238 = scalar_lea.sflag [#allocation6], %s237
        %s239 = sand.u32 %s59, 1
        %s240 = smul.addr %s239, 16
        %s241 = scalar_lea.vmem [#allocation5], %s240
        // Predicated region
        $region37: #{tpu_custom_call.1} parent=31 // pred_check
          %p242 = pneg %p72
        $region38: #{tpu_custom_call.1} parent=31 // pred_check_branch
          %244 = sbr.rel (%p242) target = $region40
        $region39: #{tpu_custom_call.1} parent=31 // pred_region
          %245 = dma.done %s238, 256
        $region40: #{tpu_custom_call.1} parent=31 // pred_fallthru
          _
        %s246 = sand.u32 %s33, 1
        %s247 = scalar_lea.sflag [#allocation3], %s246
        %s248 = sand.u32 %s33, 1
        %s249 = smul.addr %s248, 16
        %s250 = scalar_lea.vmem [#allocation2], %s249
        %p251 = pneg %p46
        %p252 = pneg %p43
        %s253 = sand.u32 %s59, 1
        %s254 = scalar_lea.sflag [#allocation6], %s253
        %s255 = sand.u32 %s59, 1
        %s256 = smul.addr %s255, 16
        %s257 = scalar_lea.vmem [#allocation5], %s256
        %p258 = pneg %p72
        %p259 = pneg %p69
        %p260 = pneg %p93
        %p261 = pneg %p90
        %p262 = pneg %p119
        %p263 = pneg %p116
        %s264 = sand.u32 %s106, 1
        %s265 = sand.u32 %s106, 1
        %s266 = smul.addr %s265, 16
        %s267 = scalar_lea.vmem [#allocation7], %s266
        %p268 = pneg %p145
        %p269 = pneg %p142
        %s270 = sand.u32 %s132, 1
        %s271 = scalar_lea.sflag [#allocation4], %s270
        %s272 = sand.u32 %s132, 1
        %s273 = smul.addr %s272, 16
        %s274 = scalar_lea.vmem [#allocation8], %s273
        %s275 = smul.u32 2, %s25
        %s276 = ssub.s32 3, %s275
        %p277 = scmp.lt.s32.totalorder %s276, 2
        %s278 = scalar_select %p277, %s276, 2
        %s279 = smul.u32 128, %s278
        %s280 = smul.u32 2, %s25
        %s281 = ssub.s32 3, %s280
        %p282 = scmp.lt.s32.totalorder %s281, 2
        %s283 = scalar_select %p282, %s281, 2
        %s284 = smul.u32 128, %s283
        %s285 = smul.u32 2, %s25
        %s286 = ssub.s32 3, %s285
        %p287 = scmp.lt.s32.totalorder %s286, 2
        %s288 = scalar_select %p287, %s286, 2
        %s289 = smul.u32 128, %s288
        %s290 = smul.u32 2, %s25
        %s291 = ssub.s32 3, %s290
        %p292 = scmp.lt.s32.totalorder %s291, 2
        %s293 = scalar_select %p292, %s291, 2
        %s294 = smul.u32 128, %s293
        %v295 = vld [vmem:[%s232] sm:$0xff]
        %v296 = vld [vmem:[%s232 + $0x8] sm:$0xff]
        %v297 = vld [vmem:[%s241] sm:$0xff]
        %v298 = vld [vmem:[%s241 + $0x8] sm:$0xff]
        %v299 = vld [vmem:[%s2] sm:$0x1]
        %300 = vmax.xlane.f32.xlu0 %v295
        %v301 = vpop.xlane.xlu0 %300
        %302 = vmax.xlane.f32.xlu0 %v296
        %v303 = vpop.xlane.xlu0 %302
        %v304 = vsub.f32 %v295, %v301
        %v305 = vsub.f32 %v296, %v303
        %v306 = vmul.f32 %v304, 1.442695
        %v307 = vpow.pop %v306
        %v308 = vmul.f32 %v305, 1.442695
        %v309 = vpow.pop %v308
        %310 = vadd.xlane.f32.xlu0 %v307
        %v311 = vpop.xlane.xlu0 %310
        %312 = vadd.xlane.f32.xlu0 %v309
        %v313 = vpop.xlane.xlu0 %312
        %v314 = vlog2.pop %v311
        %v315 = vmul.f32 %v314, 0.6931472
        %v316 = vlog2.pop %v313
        %v317 = vmul.f32 %v316, 0.6931472
        %v318 = vsub.f32 %v304, %v315
        %v319 = vsub.f32 %v305, %v317
        %v320 = vmul.f32 %v297, %v318
        %v321 = vmul.f32 %v298, %v319
        %322 = vadd.xlane.f32.xlu0 %v320
        %v323 = vpop.xlane.xlu0 %322
        %324 = vadd.xlane.f32.xlu0 %v321
        %v325 = vpop.xlane.xlu0 %324
        %v326 = vsub.f32 0.0, %v323
        %v327 = vsub.f32 0.0, %v325
        %vm328 = vcmask 7168
        %329 = vst.msk [vmem:[%s267] sm:$0xff] %vm328, %v326
        %330 = vst.msk [vmem:[%s267 + $0x8] sm:$0xff] %vm328, %v327
        %vm331 = vcmp.gt.f32.partialorder %v297, 0.0
        %vm332 = vcmp.gt.f32.partialorder %v298, 0.0
        %v333 = vsel %vm331, 1.0, %v297
        %v334 = vsel %vm332, 1.0, %v298
        %v335 = vmul.f32 %v333, %v307
        %v336 = vmul.f32 %v334, %v309
        %v338 = vlaneseq
        %v339 = vshrl.u32 %v338, 7
        %v340 = vsub.s32 0, %v339
        %v341 = vrot.slane %v299, %v340
        %v343 = vmul.f32 %v335, %v341
        %v344 = vmul.f32 %v336, %v341
        %345 = vadd.xlane.f32.xlu0 %v343
        %v346 = vpop.xlane.xlu0 %345
        %347 = vadd.xlane.f32.xlu0 %v344
        %v348 = vpop.xlane.xlu0 %347
        %v349 = vrcp.pop %v346
        %v350 = vrcp.pop %v348
        %v351 = vmul.f32 %v343, %v349
        %v352 = vmul.f32 %v344, %v350
        %353 = vst [vmem:[%s274] sm:$0xff] %v351
        %354 = vst [vmem:[%s274 + $0x8] sm:$0xff] %v352
        %s355 = sand.u32 %s106, 1
        %s356 = sand.u32 %s106, 1
        %s357 = smul.addr %s356, 16
        %s358 = scalar_lea.vmem [#allocation7], %s357
        %s359 = sand.u32 %s132, 1
        %s360 = scalar_lea.sflag [#allocation4], %s359
        %s361 = sand.u32 %s132, 1
        %s362 = smul.addr %s361, 16
        %s363 = scalar_lea.vmem [#allocation8], %s362
        // Predicated region
        $region41: #{tpu_custom_call.1} parent=31 // pred_check
          %p364 = pneg %p116
        $region42: #{tpu_custom_call.1} parent=31 // pred_check_branch
          %366 = sbr.rel (%p364) target = $region44
        $region43: #{tpu_custom_call.1} parent=31 // pred_region
          %s367 = smul.u32 2, %s25
          %s368 = ssub.s32 3, %s367
          %p369 = scmp.lt.s32.totalorder %s368, 2
          %s370 = scalar_select %p369, %s368, 2
          %s371 = smul.u32 128, %s370
          %p372 = scmp.ne.s32.totalorder 0, %s371
          %s373 = smul.addr %s367, 8
          %s374 = scalar_lea.vmem %s3, %s373
          // Predicated region
          $region45: #{tpu_custom_call.1} parent=43 // pred_check
            %p375 = pneg %p372
          $region46: #{tpu_custom_call.1} parent=43 // pred_check_branch
            %377 = sbr.rel (%p375) target = $region48
          $region47: #{tpu_custom_call.1} parent=43 // pred_region
            // Predicated region
            $region49: #{tpu_custom_call.1} parent=47 // pred_check
              _
            $region50: #{tpu_custom_call.1} parent=47 // pred_check_branch
              %379 = sbr.rel (0) target = $region52
            $region51: #{tpu_custom_call.1} parent=47 // pred_region
              // Predicated region
              $region71: #{tpu_custom_call.1} parent=51 // pred_check
                _
              $region72: #{tpu_custom_call.1} parent=51 // pred_check_branch
                %430 = sbr.rel (0) target = $region74
              $region73: #{tpu_custom_call.1} parent=51 // pred_region
                %s431 = sshrl.u32 %s370, 1
                // While loop
                $region75: #{tpu_custom_call.1} parent=73 // loop_pre_header
                  _
                $region76: #{tpu_custom_call.1} parent=73 // loop_header
                  %s433 = sphi 0, %s435
                  %p434 = scmp.ge.s32.totalorder %s433, %s431
                  %s438 = sphi 0, %s447
                  %s439 = sphi %s358, %s450
                  %s440 = sphi %s374, %s451
                $region77: #{tpu_custom_call.1} parent=73 // loop_header_branch
                  %437 = sbr.rel (%p434) target = $region81
                $region78: #{tpu_custom_call.1} parent=73 // loop_body
                  %v441 = vld [vmem:[%s439] sm:$0xff]
                  %442 = vst [vmem:[%s440] sm:$0xff] %v441
                  %v443 = vld [vmem:[%s439 + $0x8] sm:$0xff]
                  %444 = vst [vmem:[%s440 + $0x8] sm:$0xff] %v443
                  %s445 = sadd.s32 1, %s438
                  %p446 = scmp.ge.s32.totalorder %s445, %s431
                  %s447 = scalar_select %p446, 0, %s445
                  %s448 = smul.u32 %s447, 16
                  %s449 = smul.u32 %s447, 16
                  %s450 = scalar_lea.vmem %s358, %s448 [#allocation7]
                  %s451 = scalar_lea.vmem %s374, %s449
                $region79: #{tpu_custom_call.1} parent=73 // loop_footer
                  %s435 = sadd.s32 %s433, 1
                $region80: #{tpu_custom_call.1} parent=73 // loop_footer_branch
                  %432 = sbr.rel target = $region76
                $region81: #{tpu_custom_call.1} parent=73 // loop_exit
                  _
                %s452 = sshrl.u32 %s370, 1
                %s453 = sand.u32 %s370, 1
                %s454 = smul.u32 %s452, 2
                %s455 = smul.u32 8, %s454
                %s456 = scalar_lea.vmem %s358, %s455 [#allocation7]
                %s457 = smul.u32 8, %s454
                %s458 = scalar_lea.vmem %s374, %s457
                // While loop
                $region82: #{tpu_custom_call.1} parent=73 // loop_pre_header
                  _
                $region83: #{tpu_custom_call.1} parent=73 // loop_header
                  %s460 = sphi 0, %s462
                  %p461 = scmp.ge.s32.totalorder %s460, %s453
                  %s465 = sphi 0, %s472
                  %s466 = sphi %s456, %s475
                  %s467 = sphi %s458, %s476
                $region84: #{tpu_custom_call.1} parent=73 // loop_header_branch
                  %464 = sbr.rel (%p461) target = $region88
                $region85: #{tpu_custom_call.1} parent=73 // loop_body
                  %v468 = vld [vmem:[%s466] sm:$0xff]
                  %469 = vst [vmem:[%s467] sm:$0xff] %v468
                  %s470 = sadd.s32 1, %s465
                  %p471 = scmp.ge.s32.totalorder %s470, %s453
                  %s472 = scalar_select %p471, 0, %s470
                  %s473 = smul.u32 %s472, 8
                  %s474 = smul.u32 %s472, 8
                  %s475 = scalar_lea.vmem %s456, %s473 [#allocation7]
                  %s476 = scalar_lea.vmem %s458, %s474
                $region86: #{tpu_custom_call.1} parent=73 // loop_footer
                  %s462 = sadd.s32 %s460, 1
                $region87: #{tpu_custom_call.1} parent=73 // loop_footer_branch
                  %459 = sbr.rel target = $region83
                $region88: #{tpu_custom_call.1} parent=73 // loop_exit
                  _
              $region74: #{tpu_custom_call.1} parent=51 // pred_fallthru
                _
              // Predicated region
              $region89: #{tpu_custom_call.1} parent=51 // pred_check
                _
              $region90: #{tpu_custom_call.1} parent=51 // pred_check_branch
                %478 = sbr.rel target = $region92
              $region91: #{tpu_custom_call.1} parent=51 // pred_region
                _
              $region92: #{tpu_custom_call.1} parent=51 // pred_fallthru
                _
            $region52: #{tpu_custom_call.1} parent=47 // pred_fallthru
              _
            // Predicated region
            $region53: #{tpu_custom_call.1} parent=47 // pred_check
              _
            $region54: #{tpu_custom_call.1} parent=47 // pred_check_branch
              %381 = sbr.rel target = $region56
            $region55: #{tpu_custom_call.1} parent=47 // pred_region
              %s383 = sshrl.u32 %s370, 1
              // While loop
              $region57: #{tpu_custom_call.1} parent=55 // loop_pre_header
                _
              $region58: #{tpu_custom_call.1} parent=55 // loop_header
                %s385 = sphi 0, %s387
                %p386 = scmp.ge.s32.totalorder %s385, %s383
                %s390 = sphi 0, %s399
                %s391 = sphi %s358, %s402
                %s392 = sphi %s374, %s403
              $region59: #{tpu_custom_call.1} parent=55 // loop_header_branch
                %389 = sbr.rel (%p386) target = $region63
              $region60: #{tpu_custom_call.1} parent=55 // loop_body
                %v393 = vld [vmem:[%s391] sm:$0xff]
                %394 = vst [vmem:[%s392] sm:$0xff] %v393
                %v395 = vld [vmem:[%s391 + $0x8] sm:$0xff]
                %396 = vst [vmem:[%s392 + $0x8] sm:$0xff] %v395
                %s397 = sadd.s32 1, %s390
                %p398 = scmp.ge.s32.totalorder %s397, %s383
                %s399 = scalar_select %p398, 0, %s397
                %s400 = smul.u32 %s399, 16
                %s401 = smul.u32 %s399, 16
                %s402 = scalar_lea.vmem %s358, %s400 [#allocation7]
                %s403 = scalar_lea.vmem %s374, %s401
              $region61: #{tpu_custom_call.1} parent=55 // loop_footer
                %s387 = sadd.s32 %s385, 1
              $region62: #{tpu_custom_call.1} parent=55 // loop_footer_branch
                %384 = sbr.rel target = $region58
              $region63: #{tpu_custom_call.1} parent=55 // loop_exit
                _
              %s404 = sshrl.u32 %s370, 1
              %s405 = sand.u32 %s370, 1
              %s406 = smul.u32 %s404, 2
              %s407 = smul.u32 8, %s406
              %s408 = scalar_lea.vmem %s358, %s407 [#allocation7]
              %s409 = smul.u32 8, %s406
              %s410 = scalar_lea.vmem %s374, %s409
              // While loop
              $region64: #{tpu_custom_call.1} parent=55 // loop_pre_header
                _
              $region65: #{tpu_custom_call.1} parent=55 // loop_header
                %s412 = sphi 0, %s414
                %p413 = scmp.ge.s32.totalorder %s412, %s405
                %s417 = sphi 0, %s424
                %s418 = sphi %s408, %s427
                %s419 = sphi %s410, %s428
              $region66: #{tpu_custom_call.1} parent=55 // loop_header_branch
                %416 = sbr.rel (%p413) target = $region70
              $region67: #{tpu_custom_call.1} parent=55 // loop_body
                %v420 = vld [vmem:[%s418] sm:$0xff]
                %421 = vst [vmem:[%s419] sm:$0xff] %v420
                %s422 = sadd.s32 1, %s417
                %p423 = scmp.ge.s32.totalorder %s422, %s405
                %s424 = scalar_select %p423, 0, %s422
                %s425 = smul.u32 %s424, 8
                %s426 = smul.u32 %s424, 8
                %s427 = scalar_lea.vmem %s408, %s425 [#allocation7]
                %s428 = scalar_lea.vmem %s410, %s426
              $region68: #{tpu_custom_call.1} parent=55 // loop_footer
                %s414 = sadd.s32 %s412, 1
              $region69: #{tpu_custom_call.1} parent=55 // loop_footer_branch
                %411 = sbr.rel target = $region65
              $region70: #{tpu_custom_call.1} parent=55 // loop_exit
                _
            $region56: #{tpu_custom_call.1} parent=47 // pred_fallthru
              _
          $region48: #{tpu_custom_call.1} parent=43 // pred_fallthru
            _
          %479 = vnop
        $region44: #{tpu_custom_call.1} parent=31 // pred_fallthru
          _
        // Predicated region
        $region93: #{tpu_custom_call.1} parent=31 // pred_check
          %p480 = pneg %p142
        $region94: #{tpu_custom_call.1} parent=31 // pred_check_branch
          %482 = sbr.rel (%p480) target = $region96
        $region95: #{tpu_custom_call.1} parent=31 // pred_region
          %s483 = smul.u32 2, %s25
          %s484 = ssub.s32 3, %s483
          %p485 = scmp.lt.s32.totalorder %s484, 2
          %s486 = scalar_select %p485, %s484, 2
          %s487 = smul.u32 128, %s486
          %s489 = ssub.s32 256, %s487
          %490 = vsyncadd %s360, %s489
          %p491 = scmp.ne.s32.totalorder 0, %s487
          %s492 = smul.addr %s483, 128
          %s493 = scalar_lea.hbm %s4, %s492
          %s494 = smul.u32 8, %s486
          %s495 = sshll.u32 %s363, 4
          %s496 = int_to_ptr.vmem [resolvable:$true] %s495
          %s497 = sshll.u32 %s494, 4
          %501 = dma.vmem_to_hbm [thread:$0]  (%p491), %s496, %s497, %s493, %s360, 128, 128, 8
        $region96: #{tpu_custom_call.1} parent=31 // pred_fallthru
          _
      $region32: #{tpu_custom_call.1} parent=5 // pred_fallthru
        _
      %p502 = scmp.le.s32.totalorder 2, %s20
      // Predicated region
      $region97: #{tpu_custom_call.1} parent=5 // pred_check
        %p503 = pneg %p502
      $region98: #{tpu_custom_call.1} parent=5 // pred_check_branch
        %505 = sbr.rel (%p503) target = $region100
      $region99: #{tpu_custom_call.1} parent=5 // pred_region
        %s506 = ssub.s32 %s20, 2
        // Predicated region
        $region101: #{tpu_custom_call.1} parent=99 // pred_check
          %p507 = pneg %p122
        $region102: #{tpu_custom_call.1} parent=99 // pred_check_branch
          %509 = sbr.rel (%p507) target = $region104
        $region103: #{tpu_custom_call.1} parent=99 // pred_region
          %s510 = sand.u32 %s107, 1
          %s511 = sand.u32 %s107, 1
          %s512 = smul.addr %s511, 16
          %s513 = scalar_lea.vmem [#allocation7], %s512
        $region104: #{tpu_custom_call.1} parent=99 // pred_fallthru
          _
        // Predicated region
        $region105: #{tpu_custom_call.1} parent=99 // pred_check
          %p514 = pneg %p148
        $region106: #{tpu_custom_call.1} parent=99 // pred_check_branch
          %516 = sbr.rel (%p514) target = $region108
        $region107: #{tpu_custom_call.1} parent=99 // pred_region
          %s517 = sand.u32 %s133, 1
          %s518 = scalar_lea.sflag [#allocation4], %s517
          %s519 = sand.u32 %s133, 1
          %s520 = smul.addr %s519, 16
          %s521 = scalar_lea.vmem [#allocation8], %s520
          %522 = dma.done %s518, 256
        $region108: #{tpu_custom_call.1} parent=99 // pred_fallthru
          _
      $region100: #{tpu_custom_call.1} parent=5 // pred_fallthru
        _
    $region6: #{tpu_custom_call.1} parent=1 // loop_footer
      %s24 = sadd.s32 1, %s20
    $region7: #{tpu_custom_call.1} parent=1 // loop_footer_branch
      %19 = sbr.rel target = $region3
    $region8: #{tpu_custom_call.1} parent=1 // loop_exit
      _
    %523 = vsyncpa [#allocation3], 1
    %s524 = scalar_lea.sflag [#allocation3], 1
    %525 = vsyncpa %s524, 1
    %526 = vsyncpa [#allocation6], 1
    %s527 = scalar_lea.sflag [#allocation6], 1
    %528 = vsyncpa %s527, 1
    %529 = vsyncpa [#allocation4], 1
    %s530 = scalar_lea.sflag [#allocation4], 1
    %531 = vsyncpa %s530, 1

</llo_original>
